<compile_context>
chip_gen: v7x
topology: tpu7x:2x2x1
jax: 0.10.0
libtpu: 0.0.40
codegen_flags: <defaults>
</compile_context>

<pallas_src>
import jax
import jax.numpy as jnp
from jax import lax
from jax.experimental import pallas as pl
from jax.experimental.pallas import tpu as pltpu


def _cumulative_prob_kernel(w_ref, b_ref, x_ref, out_ref):
    T = out_ref.shape[0]

    # Fused linear layer: rows 0..T-1 = hazard_fc, row T = base_hazard_fc.
    # x arrives in native (tile_b, D) layout; contract D against D so the operand
    # transpose happens on the MXU and the result stays lane-dense on the batch
    # axis: (T+1, D) x (tile_b, D)^T -> (T+1, tile_b).
    z = lax.dot_general(
        w_ref[...], x_ref[...],
        dimension_numbers=(((1,), (1,)), ((), ())),
        preferred_element_type=jnp.float32,
    ) + b_ref[...]                                              # (T+1, tile_b) f32

    hazards = jnp.maximum(z[:T, :], 0.0)                        # ReLU on hazard rows only
    base = z[T:T + 1, :]                                        # (1, tile_b)

    # cum[j, b] = sum_{i <= j} hazards[i, b]  ==  L @ hazards, L lower-triangular (T, T).
    # Tiny iota mask + f32 matmul: pure MXU/VALU filler in this DMA-bound kernel.
    row = lax.broadcasted_iota(jnp.int32, (T, T), 0)
    col = lax.broadcasted_iota(jnp.int32, (T, T), 1)
    lower_tri = (col <= row).astype(jnp.float32)
    cum = jnp.dot(lower_tri, hazards, preferred_element_type=jnp.float32)

    out_ref[...] = cum + base                                   # base broadcasts over T


def _pick_tile_b(batch, d, vmem_budget_bytes=20 << 20):
    """Largest lane-aligned batch tile whose double-buffered blocks fit the budget.

    Per batch column (double-buffered): x block f32 (4*D bytes) + out block f32
    padded to 8 sublanes (32 bytes). Budget of ~20 MiB keeps total block VMEM under
    the 32 MiB limit we request, which is safe on v5e/v6e (128 MiB physical) and
    v7x (64 MiB physical).
    """
    per_col = 2 * (4 * d + 32)
    max_tile = max(128, (vmem_budget_bytes // per_col) // 128 * 128)
    b_lanes = pl.cdiv(batch, 128) * 128
    # Prefer >= 2 roughly-equal tiles so "parallel" can shard the batch axis over
    # both TensorCores on v7x; harmless on single-core v5e/v6e.
    half = pl.cdiv(pl.cdiv(b_lanes, 2), 128) * 128
    return min(max_tile, max(half, 128), b_lanes)


def cumulative_prob_forward_tb(x, wh, bh, wb, bb, *, tile_b=None,
                               vmem_budget_bytes=20 << 20):
    """Preferred entry point: returns the lane-dense (T, B) float32 slab.

    x: (B, D) f32; wh: (T, D); bh: (T,); wb: (1, D); bb: (1,).
    Downstream consumers should read this transposed instead of paying a separate
    (B, T) transpose pass on a memory-bound op.
    """
    B, D = x.shape
    T = wh.shape[0]

    # Fuse the two linear layers into one tiny resident operand pair.
    w_fused = jnp.concatenate([wh, wb], axis=0).astype(jnp.float32)           # (T+1, D)
    b_fused = jnp.concatenate(
        [bh.reshape(T, 1), bb.reshape(1, 1)], axis=0).astype(jnp.float32)     # (T+1, 1)

    if tile_b is None:
        tile_b = _pick_tile_b(B, D, vmem_budget_bytes)

    grid = (pl.cdiv(B, tile_b),)

    return pl.pallas_call(
        _cumulative_prob_kernel,
        out_shape=jax.ShapeDtypeStruct((T, B), jnp.float32),
        grid=grid,
        in_specs=[
            pl.BlockSpec((T + 1, D), lambda i: (0, 0)),       # fused weights, resident
            pl.BlockSpec((T + 1, 1), lambda i: (0, 0)),       # fused bias, resident
            pl.BlockSpec((tile_b, D), lambda i: (i, 0)),      # x streamed in native layout
        ],
        out_specs=pl.BlockSpec((T, tile_b), lambda i: (0, i)),
        compiler_params=pltpu.CompilerParams(
            dimension_semantics=("parallel",),
            vmem_limit_bytes=32 << 20,
        ),
    )(w_fused, b_fused, x)


def cumulative_prob_forward(x, wh, bh, wb, bb, **kwargs):
    """Module-layout (B, T) output (matches the PyTorch forward exactly).

    Note: this adds a transpose pass over the output; prefer
    cumulative_prob_forward_tb when the consumer can take (T, B) directly.
    """
    return jnp.transpose(cumulative_prob_forward_tb(x, wh, bh, wb, bb, **kwargs))


def reference_forward(x, wh, bh, wb, bb):
    """Pure-JAX f32 mirror of the PyTorch module."""
    hazards = jnp.maximum(x @ wh.T + bh, 0.0)                  # (B, T)
    T = hazards.shape[1]
    rows = jnp.arange(T)[:, None]
    cols = jnp.arange(T)[None, :]
    mask = (cols >= rows).astype(jnp.float32)                  # tril(ones).T
    expanded = hazards[:, :, None] * mask[None, :, :]          # (B, T, T)
    cum = expanded.sum(axis=1)                                 # (B, T)
    base = x @ wb.T + bb                                       # (B, 1)
    return cum + base


if __name__ == "__main__":
    # Small shapes consistent with the module: batch B, feature dim D (input_dim),
    # T = len(args.month_endpoints) prediction horizons.
    B, D, T = 2, 32, 5

    key = jax.random.PRNGKey(0)
    kx, kwh, kbh, kwb, kbb = jax.random.split(key, 5)

    x = jax.random.normal(kx, (B, D), dtype=jnp.float32)

    # PyTorch nn.Linear-style uniform(-1/sqrt(D), 1/sqrt(D)) init, native (out, in) layout.
    bound = 1.0 / jnp.sqrt(jnp.float32(D))
    wh = jax.random.uniform(kwh, (T, D), jnp.float32, -bound, bound)   # hazard_fc.weight
    bh = jax.random.uniform(kbh, (T,), jnp.float32, -bound, bound)     # hazard_fc.bias
    wb = jax.random.uniform(kwb, (1, D), jnp.float32, -bound, bound)   # base_hazard_fc.weight
    bb = jax.random.uniform(kbb, (1,), jnp.float32, -bound, bound)     # base_hazard_fc.bias

    # Preferred lane-dense (T, B) output.
    out_tb = jax.block_until_ready(cumulative_prob_forward_tb(x, wh, bh, wb, bb))
    # Module-compat (B, T) output.
    out = jax.block_until_ready(cumulative_prob_forward(x, wh, bh, wb, bb))

    ref = reference_forward(x, wh, bh, wb, bb)
    assert out_tb.shape == (T, B), out_tb.shape
    assert out.shape == (B, T), out.shape
    # All-f32 path (MXU f32 matmul, f32 accumulation) -> tight tolerance.
    assert jnp.allclose(out_tb, ref.T, atol=1e-2, rtol=1e-2), (out_tb, ref.T)
    assert jnp.allclose(out, ref, atol=1e-2, rtol=1e-2), (out, ref)

    print("KERNEL_OK")
</pallas_src>

<mosaic_0001>
module attributes {stable_mosaic.version = 11 : i64} {
  func.func @_cumulative_prob_kernel(%arg0: i32, %arg1: memref<6x32xf32, #tpu.memory_space<vmem>>, %arg2: memref<6x1xf32, #tpu.memory_space<vmem>>, %arg3: memref<128x32xf32, #tpu.memory_space<vmem>>, %arg4: memref<5x128xf32, #tpu.memory_space<vmem>>) attributes {dimension_semantics = [#tpu.dimension_semantics<parallel>], iteration_bounds = array<i64: 1>, scalar_prefetch = 0 : i64, scratch_operands = 0 : i64, tpu.core_type = #tpu.core_type<tc>, window_params = [{pipeline_mode = #tpu.pipeline_mode<synchronous>, transform_indices = @transform_0, window_bounds = array<i64: 6, 32>}, {pipeline_mode = #tpu.pipeline_mode<synchronous>, transform_indices = @transform_1, window_bounds = array<i64: 6, 1>}, {transform_indices = @transform_2, window_bounds = array<i64: 128, 32>}, {transform_indices = @transform_3, window_bounds = array<i64: 5, 128>}]} {
    %c0 = arith.constant 0 : index
    %c0_0 = arith.constant 0 : index
    %0 = vector.load %arg1[%c0, %c0_0] : memref<6x32xf32, #tpu.memory_space<vmem>>, vector<6x32xf32>
    %c0_1 = arith.constant 0 : index
    %c0_2 = arith.constant 0 : index
    %1 = vector.load %arg3[%c0_1, %c0_2] : memref<128x32xf32, #tpu.memory_space<vmem>>, vector<128x32xf32>
    %cst = arith.constant dense<0.000000e+00> : vector<6x128xf32>
    %2 = tpu.matmul %0, %1, %cst {dimension_numbers = #tpu.dot_dimension_numbers<[1], [1], [0], [0], [0, 0, 1, 0], [], []>} : vector<6x32xf32>, vector<128x32xf32>, vector<6x128xf32> -> vector<6x128xf32>
    %c0_3 = arith.constant 0 : index
    %c0_4 = arith.constant 0 : index
    %3 = vector.load %arg2[%c0_3, %c0_4] : memref<6x1xf32, #tpu.memory_space<vmem>>, vector<6x1xf32>
    %4 = vector.broadcast %3 : vector<6x1xf32> to vector<6x128xf32>
    %5 = arith.addf %2, %4 : vector<6x128xf32>
    %6 = vector.extract_strided_slice %5 {offsets = [0, 0], sizes = [5, 128], strides = [1, 1]} : vector<6x128xf32> to vector<5x128xf32>
    %cst_5 = arith.constant 0.000000e+00 : f32
    %7 = vector.broadcast %cst_5 : f32 to vector<5x128xf32>
    %8 = arith.maximumf %6, %7 : vector<5x128xf32>
    %9 = vector.extract_strided_slice %5 {offsets = [5, 0], sizes = [1, 128], strides = [1, 1]} : vector<6x128xf32> to vector<1x128xf32>
    %10 = tpu.iota {dimensions = array<i32: 0>} : vector<5x5xi32>
    %11 = tpu.iota {dimensions = array<i32: 1>} : vector<5x5xi32>
    %12 = arith.cmpi sle, %11, %10 : vector<5x5xi32>
    %13 = arith.extui %12 : vector<5x5xi1> to vector<5x5xi32>
    %14 = arith.sitofp %13 : vector<5x5xi32> to vector<5x5xf32>
    %cst_6 = arith.constant dense<0.000000e+00> : vector<5x128xf32>
    %15 = tpu.matmul %14, %8, %cst_6 {dimension_numbers = #tpu.dot_dimension_numbers<[1], [0], [0], [1], [0, 0, 1, 1], [], []>} : vector<5x5xf32>, vector<5x128xf32>, vector<5x128xf32> -> vector<5x128xf32>
    %16 = vector.broadcast %9 : vector<1x128xf32> to vector<5x128xf32>
    %17 = arith.addf %15, %16 : vector<5x128xf32>
    %c0_7 = arith.constant 0 : index
    %c0_8 = arith.constant 0 : index
    %18 = vector.load %arg4[%c0_7, %c0_8] : memref<5x128xf32, #tpu.memory_space<vmem>>, vector<5x128xf32>
    tpu.vector_store %arg4[%c0_7, %c0_8], %17 {strides = array<i32>} : memref<5x128xf32, #tpu.memory_space<vmem>>, vector<5x128xf32>,
    return
  }
  func.func @transform_0(%arg0: i32) -> (i32, i32) {
    %c0_i32 = arith.constant 0 : i32
    %c0_i32_0 = arith.constant 0 : i32
    %c0_i32_1 = arith.constant 0 : i32
    return %c0_i32, %c0_i32_0 : i32, i32
  }
  func.func @transform_1(%arg0: i32) -> (i32, i32) {
    %c0_i32 = arith.constant 0 : i32
    %c0_i32_0 = arith.constant 0 : i32
    %c0_i32_1 = arith.constant 0 : i32
    return %c0_i32, %c0_i32_0 : i32, i32
  }
  func.func @transform_2(%arg0: i32) -> (i32, i32) {
    %c0_i32 = arith.constant 0 : i32
    %c0_i32_0 = arith.constant 0 : i32
    return %arg0, %c0_i32 : i32, i32
  }
  func.func @transform_3(%arg0: i32) -> (i32, i32) {
    %c0_i32 = arith.constant 0 : i32
    %c0_i32_0 = arith.constant 0 : i32
    return %c0_i32, %arg0 : i32, i32
  }
}

</mosaic_0001>

<llo_original>
// kernel: tpu_custom_call.1
$region0: #{tpu_custom_call.1}
  #allocation0 [shape = 'u32[]', space=smem, size = 0x4, offset = 0x4, fixed_abs, tag = 'smem constant byte address 0x4 - core index']
  #allocation1 [shape = 'u32[144,128]{1,0:T(1,128)}', space=vmem, size = 0x12000, scoped, tag = 'internal scratch']
  %s0 = inlined_call_operand.vmem [shape: f32[6,32], index: 0, kind: input, shape index: {}]
  %s1 = inlined_call_operand.vmem [shape: f32[6,1], index: 1, kind: input, shape index: {}]
  %s2 = inlined_call_operand.vmem [shape: f32[2,32], index: 2, kind: input, shape index: {}]
  %s3 = inlined_call_operand.vmem [shape: f32[5,2], index: 3, kind: output, shape index: {}]
  %s4 = sld [smem:[#allocation0]]
  $region22: #{tpu_custom_call.1} parent=0
    _
  %s6 = ssub.s32 1, %s4
  %s7 = scalar_select 0, %s6, %s4
  // Predicated region
  $region2: #{tpu_custom_call.1} parent=0 // pred_check
    _
  $region3: #{tpu_custom_call.1} parent=0 // pred_check_branch
    %9 = sbr.rel (0) target = $region5
  $region4: #{tpu_custom_call.1} parent=0 // pred_region
    _
  $region5: #{tpu_custom_call.1} parent=0 // pred_fallthru
    _
  // Predicated region
  $region6: #{tpu_custom_call.1} parent=0 // pred_check
    _
  $region7: #{tpu_custom_call.1} parent=0 // pred_check_branch
    %11 = sbr.rel (0) target = $region9
  $region8: #{tpu_custom_call.1} parent=0 // pred_region
    _
  $region9: #{tpu_custom_call.1} parent=0 // pred_fallthru
    _
  // Predicated region
  $region10: #{tpu_custom_call.1} parent=0 // pred_check
    _
  $region11: #{tpu_custom_call.1} parent=0 // pred_check_branch
    %13 = sbr.rel (0) target = $region13
  $region12: #{tpu_custom_call.1} parent=0 // pred_region
    _
  $region13: #{tpu_custom_call.1} parent=0 // pred_fallthru
    _
  %v14 = vld [vmem:[%s0] sm:$0x3f]
  %v15 = vld [vmem:[%s2] sm:$0xff]
  %v16 = vld [vmem:[%s2 + $0x8] sm:$0xff]
  %v17 = vld [vmem:[%s2 + $0x10] sm:$0xff]
  %v18 = vld [vmem:[%s2 + $0x18] sm:$0xff]
  %v19 = vld [vmem:[%s2 + $0x20] sm:$0xff]
  %v20 = vld [vmem:[%s2 + $0x28] sm:$0xff]
  %v21 = vld [vmem:[%s2 + $0x30] sm:$0xff]
  %v22 = vld [vmem:[%s2 + $0x38] sm:$0xff]
  %v23 = vld [vmem:[%s2 + $0x40] sm:$0xff]
  %v24 = vld [vmem:[%s2 + $0x48] sm:$0xff]
  %v25 = vld [vmem:[%s2 + $0x50] sm:$0xff]
  %v26 = vld [vmem:[%s2 + $0x58] sm:$0xff]
  %v27 = vld [vmem:[%s2 + $0x60] sm:$0xff]
  %v28 = vld [vmem:[%s2 + $0x68] sm:$0xff]
  %v29 = vld [vmem:[%s2 + $0x70] sm:$0xff]
  %v30 = vld [vmem:[%s2 + $0x78] sm:$0xff]
  %v31 = vld [vmem:[%s1] sm:$0x3f]
  %33 = vset.pattern.permute.xlu0 0
  %34 = vperm.xlu0 %33, %v31
  %v35 = vpop.permute.xlu0 %34
  %vm37 = vcmask 261120
  %v39 = vsel %vm37, %v14, 0
  %v42 = vsel %vm37, %v15, 0
  %v45 = vsel %vm37, %v16, 0
  %v48 = vsel %vm37, %v17, 0
  %v51 = vsel %vm37, %v18, 0
  %v54 = vsel %vm37, %v19, 0
  %v57 = vsel %vm37, %v20, 0
  %v60 = vsel %vm37, %v21, 0
  %v63 = vsel %vm37, %v22, 0
  %v66 = vsel %vm37, %v23, 0
  %v69 = vsel %vm37, %v24, 0
  %v72 = vsel %vm37, %v25, 0
  %v75 = vsel %vm37, %v26, 0
  %v78 = vsel %vm37, %v27, 0
  %v81 = vsel %vm37, %v28, 0
  %v84 = vsel %vm37, %v29, 0
  %v87 = vsel %vm37, %v30, 0
  %89 = vmatprep.subr.mxu0 0.0
  %90 = vmatpush1.xpose.msra.mxu0 %v42
  %91 = vmatprep.subr.mxu0 0.0
  %92 = vmatpush1.xpose.msra.mxu0 %v45
  %93 = vmatprep.subr.mxu0 0.0
  %94 = vmatpush1.xpose.msra.mxu0 %v48
  %95 = vmatprep.subr.mxu0 0.0
  %96 = vmatpush1.xpose.msra.mxu0 %v51
  %97 = vmatprep.subr.mxu0 0.0
  %98 = vmatpush1.xpose.msra.mxu0 %v54
  %99 = vmatprep.subr.mxu0 0.0
  %100 = vmatpush1.xpose.msra.mxu0 %v57
  %101 = vmatprep.subr.mxu0 0.0
  %102 = vmatpush1.xpose.msra.mxu0 %v60
  %103 = vmatprep.subr.mxu0 0.0
  %104 = vmatpush1.xpose.msra.mxu0 %v63
  %105 = vmatprep.subr.mxu0 0.0
  %106 = vmatpush1.xpose.msra.mxu0 %v66
  %107 = vmatprep.subr.mxu0 0.0
  %108 = vmatpush1.xpose.msra.mxu0 %v69
  %109 = vmatprep.subr.mxu0 0.0
  %110 = vmatpush1.xpose.msra.mxu0 %v72
  %111 = vmatprep.subr.mxu0 0.0
  %112 = vmatpush1.xpose.msra.mxu0 %v75
  %113 = vmatprep.subr.mxu0 0.0
  %114 = vmatpush1.xpose.msra.mxu0 %v78
  %115 = vmatprep.subr.mxu0 0.0
  %116 = vmatpush1.xpose.msra.mxu0 %v81
  %117 = vmatprep.subr.mxu0 0.0
  %118 = vmatpush1.xpose.msra.mxu0 %v84
  %119 = vmatprep.subr.mxu0 0.0
  %120 = vmatpush1.xpose.msra.mxu0 %v87
  %121 = vmatprep.subr.mxu0 0.0
  %122 = vmatpush1.xpose.msra.mxu0 0.0
  %123 = vmatprep.subr.mxu0 0.0
  %124 = vmatpush1.xpose.msra.mxu0 0.0
  %125 = vmatprep.subr.mxu0 0.0
  %126 = vmatpush1.xpose.msra.mxu0 0.0
  %127 = vmatprep.subr.mxu0 0.0
  %128 = vmatpush1.xpose.msra.mxu0 0.0
  %129 = vmatprep.subr.mxu0 0.0
  %130 = vmatpush1.xpose.msra.mxu0 0.0
  %131 = vmatprep.subr.mxu0 0.0
  %132 = vmatpush1.xpose.msra.mxu0 0.0
  %133 = vmatprep.subr.mxu0 0.0
  %134 = vmatpush1.xpose.msra.mxu0 0.0
  %135 = vmatprep.subr.mxu0 0.0
  %136 = vmatpush1.xpose.msra.mxu0 0.0
  %137 = vmatprep.subr.mxu0 0.0
  %138 = vmatpush1.xpose.msra.mxu0 0.0
  %139 = vmatprep.subr.mxu0 0.0
  %140 = vmatpush1.xpose.msra.mxu0 0.0
  %141 = vmatprep.subr.mxu0 0.0
  %142 = vmatpush1.xpose.msra.mxu0 0.0
  %143 = vmatprep.subr.mxu0 0.0
  %144 = vmatpush1.xpose.msra.mxu0 0.0
  %145 = vmatprep.subr.mxu0 0.0
  %146 = vmatpush1.xpose.msra.mxu0 0.0
  %147 = vmatprep.subr.mxu0 0.0
  %148 = vmatpush1.xpose.msra.mxu0 0.0
  %149 = vmatprep.subr.mxu0 0.0
  %150 = vmatpush1.xpose.msra.mxu0 0.0
  %151 = vmatprep.subr.mxu0 0.0
  %152 = vmatpush1.xpose.msra.mxu0 0.0
  %153 = vmatprep.mubr.f32.mxu0 0.0
  %154 = vmatmul.mubr.f32.gmra.mrb[0].mxu0 %v39
  %v155 = vpop.f32.mrb[0].mxu0
  %v156 = vadd.f32 %v35, %v155
  %v157 = vpop.f32.mrb[0].mxu0
  %158 = vdwg.mxu0
  %v159 = vmax.f32 %v156, 0.0
  %v160 = vlaneseq
  %v161 = vshrl.u32 %v160, 7
  %v162 = vlaneseq
  %v163 = vand.u32 %v162, 127
  %vm164 = vcmp.le.s32.totalorder %v163, %v161
  %v165 = vsel %vm164, 1, 0
  %v166 = vcvt.s32.f32 %v165
  %v167 = vlaneseq
  %v168 = vshrl.u32 %v167, 7
  %v169 = vsub.s32 5, %v168
  %v170 = vrot.slane %v156, %v169
  %vm171 = vcmask 39936
  %v173 = vsel %vm171, %v166, 0
  %vm175 = vcmask 1044480
  %v177 = vsel %vm175, %v159, 0
  %179 = vmatprep.subr.mxu0 0.0
  %180 = vmatpush1.msra.mxu0 %v177
  %181 = vmatprep.subr.mxu0 0.0
  %182 = vmatpush1.msra.mxu0 0.0
  %183 = vmatprep.subr.mxu0 0.0
  %184 = vmatpush1.msra.mxu0 0.0
  %185 = vmatprep.subr.mxu0 0.0
  %186 = vmatpush1.msra.mxu0 0.0
  %187 = vmatprep.subr.mxu0 0.0
  %188 = vmatpush1.msra.mxu0 0.0
  %189 = vmatprep.subr.mxu0 0.0
  %190 = vmatpush1.msra.mxu0 0.0
  %191 = vmatprep.subr.mxu0 0.0
  %192 = vmatpush1.msra.mxu0 0.0
  %193 = vmatprep.subr.mxu0 0.0
  %194 = vmatpush1.msra.mxu0 0.0
  %195 = vmatprep.subr.mxu0 0.0
  %196 = vmatpush1.msra.mxu0 0.0
  %197 = vmatprep.subr.mxu0 0.0
  %198 = vmatpush1.msra.mxu0 0.0
  %199 = vmatprep.subr.mxu0 0.0
  %200 = vmatpush1.msra.mxu0 0.0
  %201 = vmatprep.subr.mxu0 0.0
  %202 = vmatpush1.msra.mxu0 0.0
  %203 = vmatprep.subr.mxu0 0.0
  %204 = vmatpush1.msra.mxu0 0.0
  %205 = vmatprep.subr.mxu0 0.0
  %206 = vmatpush1.msra.mxu0 0.0
  %207 = vmatprep.subr.mxu0 0.0
  %208 = vmatpush1.msra.mxu0 0.0
  %209 = vmatprep.subr.mxu0 0.0
  %210 = vmatpush1.msra.mxu0 0.0
  %211 = vmatprep.subr.mxu0 0.0
  %212 = vmatpush1.msra.mxu0 0.0
  %213 = vmatprep.subr.mxu0 0.0
  %214 = vmatpush1.msra.mxu0 0.0
  %215 = vmatprep.subr.mxu0 0.0
  %216 = vmatpush1.msra.mxu0 0.0
  %217 = vmatprep.subr.mxu0 0.0
  %218 = vmatpush1.msra.mxu0 0.0
  %219 = vmatprep.subr.mxu0 0.0
  %220 = vmatpush1.msra.mxu0 0.0
  %221 = vmatprep.subr.mxu0 0.0
  %222 = vmatpush1.msra.mxu0 0.0
  %223 = vmatprep.subr.mxu0 0.0
  %224 = vmatpush1.msra.mxu0 0.0
  %225 = vmatprep.subr.mxu0 0.0
  %226 = vmatpush1.msra.mxu0 0.0
  %227 = vmatprep.subr.mxu0 0.0
  %228 = vmatpush1.msra.mxu0 0.0
  %229 = vmatprep.subr.mxu0 0.0
  %230 = vmatpush1.msra.mxu0 0.0
  %231 = vmatprep.subr.mxu0 0.0
  %232 = vmatpush1.msra.mxu0 0.0
  %233 = vmatprep.subr.mxu0 0.0
  %234 = vmatpush1.msra.mxu0 0.0
  %235 = vmatprep.subr.mxu0 0.0
  %236 = vmatpush1.msra.mxu0 0.0
  %237 = vmatprep.subr.mxu0 0.0
  %238 = vmatpush1.msra.mxu0 0.0
  %239 = vmatprep.subr.mxu0 0.0
  %240 = vmatpush1.msra.mxu0 0.0
  %241 = vmatprep.subr.mxu0 0.0
  %242 = vmatpush1.msra.mxu0 0.0
  %243 = vmatprep.mubr.f32.mxu0 0.0
  %244 = vmatmul.mubr.f32.gmra.mrb[0].mxu0 %v173
  %v245 = vpop.f32.mrb[0].mxu0
  %v246 = vadd.f32 %v170, %v245
  %v247 = vpop.f32.mrb[0].mxu0
  %248 = vdwg.mxu0
  %249 = vst [vmem:[%s3] sm:$0x1f] %v246
  // Predicated region
  $region14: #{tpu_custom_call.1} parent=0 // pred_check
    _
  $region15: #{tpu_custom_call.1} parent=0 // pred_check_branch
    %251 = sbr.rel (0) target = $region17
  $region16: #{tpu_custom_call.1} parent=0 // pred_region
    _
  $region17: #{tpu_custom_call.1} parent=0 // pred_fallthru
    _
  // Predicated region
  $region18: #{tpu_custom_call.1} parent=0 // pred_check
    _
  $region19: #{tpu_custom_call.1} parent=0 // pred_check_branch
    %253 = sbr.rel (0) target = $region21
  $region20: #{tpu_custom_call.1} parent=0 // pred_region
    _
  $region21: #{tpu_custom_call.1} parent=0 // pred_fallthru
    _

</llo_original>
